<compile_context>
chip_gen: v7x
topology: tpu7x:2x2x1
jax: 0.10.0
libtpu: 0.0.40
codegen_flags: <defaults>
</compile_context>

<pallas_src>
import functools

import jax
import jax.numpy as jnp
from jax.experimental import pallas as pl
from jax.experimental.pallas import tpu as pltpu

EPS = 1e-5
LANE = 128
SUBLANE = 8


def _round_up(n, m):
    return ((n + m - 1) // m) * m


# ----------------------------------------------------------------------------
# Single fused kernel (grid-less)
# ----------------------------------------------------------------------------
def _generator_kernel(n_ref, x_ref, bn_ref, bfin_ref, w_ref, out_ref, cat_ref,
                      *, out_pads, k_pads, w_row_offs):
    """Fused Residual* + final Linear.

    n_ref    : SMEM (1,) int32       number of real (unpadded) batch rows.
    x_ref    : VMEM (B_pad, e_pad)   zero-padded latent input, f32.
    bn_ref   : VMEM (8*L, d_bn) f32  rows [8l+0]=bias, [8l+1]=gamma, [8l+2]=beta.
    bfin_ref : VMEM (1, o_pad) f32   final-linear bias.
    w_ref    : VMEM (R_total, d_col) all layer weights, pre-packed/reordered.
    out_ref  : VMEM (B_pad, o_pad) f32.
    cat_ref  : VMEM scratch (B_pad, C_total) — resident "virtual concat"
               buffer laid out as [x | y_0 | y_1 | ... | y_{L-1}].
    """
    b_pad = x_ref.shape[0]
    e_pad = x_ref.shape[1]
    o_pad = out_ref.shape[1]
    cdt = cat_ref.dtype
    num_layers = len(out_pads)

    n_f = n_ref[0].astype(jnp.float32)
    inv_n = 1.0 / n_f
    m_f = jnp.float32(b_pad) - n_f            # number of (identical) pad rows

    # Seed the concat buffer with the (already zero-padded) input x.
    cat_ref[:, 0:e_pad] = x_ref[...].astype(cdt)

    for l in range(num_layers):
        k = k_pads[l]                          # consumed prefix width
        p = out_pads[l]                        # this layer's padded width
        r = w_row_offs[l]

        # One packed-K matmul per layer: accumulation stays inside the MXU.
        h = jnp.dot(cat_ref[:, 0:k], w_ref[r:r + k, 0:p],
                    preferred_element_type=jnp.float32)

        bias = bn_ref[SUBLANE * l + 0:SUBLANE * l + 1, 0:p]
        gamma = bn_ref[SUBLANE * l + 1:SUBLANE * l + 2, 0:p]
        beta = bn_ref[SUBLANE * l + 2:SUBLANE * l + 3, 0:p]
        h = h + bias

        # BatchNorm1d training-mode statistics, f32, two-pass form.
        # Padded batch rows are all identical (they descend from all-zero x
        # rows), so real-row sums = full sums - m * (any padded row).
        h_pad = h[b_pad - 1:b_pad, :]
        s1 = jnp.sum(h, axis=0, keepdims=True) - m_f * h_pad
        mean = s1 * inv_n
        c = h - mean
        c_pad = c[b_pad - 1:b_pad, :]
        s2 = jnp.sum(c * c, axis=0, keepdims=True) - m_f * (c_pad * c_pad)
        var = jnp.maximum(s2 * inv_n, 0.0)

        y = gamma * (c * jax.lax.rsqrt(var + EPS)) + beta
        y = jnp.maximum(y, 0.0)                # ReLU
        # torch.cat([out, input], dim=1) == write y into its aligned slice.
        cat_ref[:, k:k + p] = y.astype(cdt)

    # Final Linear over the whole resident concat buffer.
    k = k_pads[num_layers]
    r = w_row_offs[num_layers]
    out = jnp.dot(cat_ref[:, 0:k], w_ref[r:r + k, 0:o_pad],
                  preferred_element_type=jnp.float32)
    out_ref[...] = out + bfin_ref[...]         # lane-dense unmasked store


# ----------------------------------------------------------------------------
# Wrapper: pad / reorder / pack parameters, one pallas_call for the forward
# ----------------------------------------------------------------------------
def _pad2(a, rows, cols):
    return jnp.pad(a, ((0, rows - a.shape[0]), (0, cols - a.shape[1])))


def _pad1(v, cols):
    return jnp.pad(v, (0, cols - v.shape[0]))


def generator_forward(params, x, *, weight_dtype=jnp.bfloat16,
                      interpret=False):
    batch, e_dim = x.shape
    gen_dims = [p["w_t"].shape[1] for p in params["residuals"]]
    data_dim = params["final"]["w_t"].shape[1]
    num_layers = len(gen_dims)

    b_pad = _round_up(max(batch, SUBLANE), SUBLANE)
    e_pad = _round_up(e_dim, LANE)
    out_pads = [_round_up(d, LANE) for d in gen_dims]
    o_pad = _round_up(data_dim, LANE)
    d_bn = max(out_pads) if out_pads else LANE
    d_col = max(out_pads + [o_pad])

    # k_pads[l] = padded width of the concat prefix consumed by layer l
    # (also the column offset where y_l is written).
    k_pads = [e_pad]
    for p in out_pads:
        k_pads.append(k_pads[-1] + p)
    c_total = k_pads[-1]

    # ---- inputs --------------------------------------------------------
    x_p = _pad2(x.astype(jnp.float32), b_pad, e_pad)

    # Packed BN params: one 8-sublane block per layer (bias, gamma, beta).
    bn_packed = jnp.zeros((SUBLANE * max(num_layers, 1), d_bn), jnp.float32)
    for l, p in enumerate(params["residuals"]):
        bn_packed = bn_packed.at[SUBLANE * l + 0, :gen_dims[l]].set(p["b"])
        bn_packed = bn_packed.at[SUBLANE * l + 1, :gen_dims[l]].set(p["gamma"])
        bn_packed = bn_packed.at[SUBLANE * l + 2, :gen_dims[l]].set(p["beta"])

    b_fin = _pad1(params["final"]["b"].astype(jnp.float32), o_pad)[None, :]

    # ---- pre-pack ALL weights into one array (one DMA) -----------------
    # Buffer (and packed row) order is [x, y_0, ..., y_{l-1}]; torch stores
    # layer-l rows in concat order [y_{l-1}, ..., y_0, x], so reorder here.
    def packed_weight(w_t, n_y):
        seg_off = {}
        off = 0
        for j in range(n_y - 1, -1, -1):       # torch order: y_{n_y-1} ... y_0
            seg_off[j] = off
            off += gen_dims[j]
        x_off = off
        pieces = [_pad2(w_t[x_off:x_off + e_dim, :], e_pad, d_col)]
        for j in range(n_y):                   # buffer order: y_0 ... y_{n_y-1}
            pieces.append(_pad2(w_t[seg_off[j]:seg_off[j] + gen_dims[j], :],
                                out_pads[j], d_col))
        return jnp.concatenate(pieces, axis=0)          # (k_pads[n_y], d_col)

    w_blocks, w_row_offs, row = [], [], 0
    for l, p in enumerate(params["residuals"]):
        blk = packed_weight(p["w_t"].astype(jnp.float32), l)
        w_blocks.append(blk)
        w_row_offs.append(row)
        row += blk.shape[0]
    blk = packed_weight(params["final"]["w_t"].astype(jnp.float32), num_layers)
    w_blocks.append(blk)
    w_row_offs.append(row)
    row += blk.shape[0]
    w_all = jnp.concatenate(w_blocks, axis=0).astype(weight_dtype)

    n_arr = jnp.array([batch], dtype=jnp.int32)

    # ---- explicit VMEM budget + cost estimate ---------------------------
    def nbytes(a):
        return a.size * a.dtype.itemsize

    act_bytes = b_pad * c_total * jnp.dtype(weight_dtype).itemsize
    out_bytes = b_pad * o_pad * 4
    in_bytes = nbytes(x_p) + nbytes(bn_packed) + nbytes(b_fin) + nbytes(w_all)
    vmem_needed = in_bytes + out_bytes + act_bytes
    vmem_limit = int(min(128 * 2 ** 20,
                         max(32 * 2 ** 20, 2 * vmem_needed + (2 << 20))))

    flops = 2 * b_pad * sum(k_pads[l] * out_pads[l] for l in range(num_layers))
    flops += 2 * b_pad * k_pads[num_layers] * o_pad
    cost = pl.CostEstimate(flops=int(flops),
                           transcendentals=int(num_layers * d_bn),
                           bytes_accessed=int(in_bytes + out_bytes))

    kernel = functools.partial(
        _generator_kernel,
        out_pads=tuple(out_pads),
        k_pads=tuple(k_pads),
        w_row_offs=tuple(w_row_offs))

    vmem = pl.BlockSpec(memory_space=pltpu.MemorySpace.VMEM)
    smem = pl.BlockSpec(memory_space=pltpu.MemorySpace.SMEM)

    out_padded = pl.pallas_call(
        kernel,
        out_shape=jax.ShapeDtypeStruct((b_pad, o_pad), jnp.float32),
        in_specs=[smem, vmem, vmem, vmem, vmem],
        out_specs=vmem,
        scratch_shapes=[pltpu.VMEM((b_pad, c_total), weight_dtype)],
        compiler_params=pltpu.CompilerParams(vmem_limit_bytes=vmem_limit),
        cost_estimate=cost,
        interpret=interpret,
    )(n_arr, x_p, bn_packed, b_fin, w_all)

    return out_padded[:batch, :data_dim]


# ----------------------------------------------------------------------------
# Deterministic parameter init (matches nn.Linear / BatchNorm1d defaults)
# ----------------------------------------------------------------------------
def init_generator_params(key, embedding_dim, generator_dim, data_dim):
    params = {"residuals": []}
    dim = embedding_dim
    for item in generator_dim:
        key, kw, kb = jax.random.split(key, 3)
        bound = 1.0 / jnp.sqrt(dim)
        params["residuals"].append(
            {
                # stored pre-transposed: (in, out); row order follows the
                # torch concat order [y_{l-1}, ..., y_0, x].
                "w_t": jax.random.uniform(kw, (dim, item), jnp.float32, -bound, bound),
                "b": jax.random.uniform(kb, (item,), jnp.float32, -bound, bound),
                "gamma": jnp.ones((item,), jnp.float32),
                "beta": jnp.zeros((item,), jnp.float32),
            }
        )
        dim += item
    key, kw, kb = jax.random.split(key, 3)
    bound = 1.0 / jnp.sqrt(dim)
    params["final"] = {
        "w_t": jax.random.uniform(kw, (dim, data_dim), jnp.float32, -bound, bound),
        "b": jax.random.uniform(kb, (data_dim,), jnp.float32, -bound, bound),
    }
    return params


# ----------------------------------------------------------------------------
# Pure-JAX reference (PyTorch semantics); weight_dtype mirrors the kernel's
# matmul-operand precision policy (f32 => exact original semantics).
# ----------------------------------------------------------------------------
def _reference_forward(params, x, weight_dtype=jnp.float32):
    wdt = weight_dtype
    prec = jax.lax.Precision.HIGHEST
    h = x.astype(jnp.float32)
    for p in params["residuals"]:
        z = jnp.dot(h.astype(wdt), p["w_t"].astype(wdt),
                    preferred_element_type=jnp.float32, precision=prec) + p["b"]
        mean = jnp.mean(z, axis=0, keepdims=True)
        var = jnp.mean((z - mean) ** 2, axis=0, keepdims=True)
        y = p["gamma"] * (z - mean) / jnp.sqrt(var + EPS) + p["beta"]
        y = jnp.maximum(y, 0.0)
        h = jnp.concatenate([y, h], axis=1)
    return (jnp.dot(h.astype(wdt), params["final"]["w_t"].astype(wdt),
                    preferred_element_type=jnp.float32, precision=prec)
            + params["final"]["b"])


if __name__ == "__main__":
    embedding_dim = 32
    generator_dim = (32, 32)
    data_dim = 16
    batch = 6   # deliberately NOT a multiple of 8: exercises the
                # padded-row-corrected BatchNorm statistics.

    key = jax.random.PRNGKey(0)
    key_params, key_x = jax.random.split(key)
    params = init_generator_params(key_params, embedding_dim, generator_dim,
                                   data_dim)
    x = jax.random.normal(key_x, (batch, embedding_dim), jnp.float32)

    # 1) exact f32 path: must match the PyTorch-semantics reference tightly.
    fwd_f32 = jax.jit(functools.partial(generator_forward,
                                        weight_dtype=jnp.float32))
    out_f32 = jax.block_until_ready(fwd_f32(params, x))
    ref_f32 = _reference_forward(params, x, jnp.float32)
    assert out_f32.shape == (batch, data_dim), out_f32.shape
    err32 = float(jnp.max(jnp.abs(out_f32 - ref_f32)))
    assert jnp.allclose(out_f32, ref_f32, atol=1e-4, rtol=1e-4), (
        f"f32 kernel mismatch vs reference, max abs err {err32}")

    # 2) default bf16-weight path (per perf review): compared against a
    #    reference applying the identical precision policy (BN stays f32).
    fwd_bf16 = jax.jit(generator_forward)
    out_bf16 = jax.block_until_ready(fwd_bf16(params, x))
    ref_bf16 = _reference_forward(params, x, jnp.bfloat16)
    assert out_bf16.shape == (batch, data_dim), out_bf16.shape
    err16 = float(jnp.max(jnp.abs(out_bf16 - ref_bf16)))
    assert jnp.allclose(out_bf16, ref_bf16, atol=2e-3, rtol=2e-3), (
        f"bf16 kernel mismatch vs bf16 reference, max abs err {err16}")

    print("KERNEL_OK")
</pallas_src>

<mosaic_0001>
module attributes {stable_mosaic.version = 11 : i64} {
  func.func @_generator_kernel(%arg0: memref<1xi32, #tpu.memory_space<smem>>, %arg1: memref<8x128xf32, #tpu.memory_space<vmem>>, %arg2: memref<16x128xf32, #tpu.memory_space<vmem>>, %arg3: memref<1x128xf32, #tpu.memory_space<vmem>>, %arg4: memref<768x128xf32, #tpu.memory_space<vmem>>, %arg5: memref<8x128xf32, #tpu.memory_space<vmem>>, %arg6: memref<8x384xf32, #tpu.memory_space<vmem>>) attributes {dimension_semantics = [], scalar_prefetch = 0 : i64, scratch_operands = 1 : i64, tpu.core_type = #tpu.core_type<tc>} {
    %c0 = arith.constant 0 : index
    %0 = memref.load %arg0[%c0] : memref<1xi32, #tpu.memory_space<smem>>
    %1 = arith.sitofp %0 : i32 to f32
    %cst = arith.constant 1.000000e+00 : f32
    %2 = arith.divf %cst, %1 : f32
    %cst_0 = arith.constant 8.000000e+00 : f32
    %3 = arith.subf %cst_0, %1 : f32
    %c0_1 = arith.constant 0 : index
    %c0_2 = arith.constant 0 : index
    %4 = vector.load %arg1[%c0_1, %c0_2] : memref<8x128xf32, #tpu.memory_space<vmem>>, vector<8x128xf32>
    %c0_3 = arith.constant 0 : index
    %c0_4 = arith.constant 0 : index
    %5 = vector.load %arg6[%c0_3, %c0_4] : memref<8x384xf32, #tpu.memory_space<vmem>>, vector<8x128xf32>
    tpu.vector_store %arg6[%c0_3, %c0_4], %4 {strides = array<i32>} : memref<8x384xf32, #tpu.memory_space<vmem>>, vector<8x128xf32>,
    %c0_5 = arith.constant 0 : index
    %c0_6 = arith.constant 0 : index
    %6 = vector.load %arg6[%c0_5, %c0_6] : memref<8x384xf32, #tpu.memory_space<vmem>>, vector<8x128xf32>
    %c0_7 = arith.constant 0 : index
    %c0_8 = arith.constant 0 : index
    %7 = vector.load %arg4[%c0_7, %c0_8] : memref<768x128xf32, #tpu.memory_space<vmem>>, vector<128x128xf32>
    %cst_9 = arith.constant dense<0.000000e+00> : vector<8x128xf32>
    %8 = tpu.matmul %6, %7, %cst_9 {dimension_numbers = #tpu.dot_dimension_numbers<[1], [0], [0], [1], [0, 0, 1, 1], [], []>} : vector<8x128xf32>, vector<128x128xf32>, vector<8x128xf32> -> vector<8x128xf32>
    %c0_10 = arith.constant 0 : index
    %c0_11 = arith.constant 0 : index
    %9 = vector.load %arg2[%c0_10, %c0_11] : memref<16x128xf32, #tpu.memory_space<vmem>>, vector<1x128xf32>
    %c1 = arith.constant 1 : index
    %c0_12 = arith.constant 0 : index
    %10 = vector.load %arg2[%c1, %c0_12] : memref<16x128xf32, #tpu.memory_space<vmem>>, vector<1x128xf32>
    %c2 = arith.constant 2 : index
    %c0_13 = arith.constant 0 : index
    %11 = vector.load %arg2[%c2, %c0_13] : memref<16x128xf32, #tpu.memory_space<vmem>>, vector<1x128xf32>
    %12 = vector.broadcast %9 : vector<1x128xf32> to vector<8x128xf32>
    %13 = arith.addf %8, %12 : vector<8x128xf32>
    %14 = vector.extract_strided_slice %13 {offsets = [7, 0], sizes = [1, 128], strides = [1, 1]} : vector<8x128xf32> to vector<1x128xf32>
    %cst_14 = arith.constant dense<0.000000e+00> : vector<128xf32>
    %15 = vector.multi_reduction <add>, %13, %cst_14 [0] : vector<8x128xf32> to vector<128xf32>
    %16 = vector.shape_cast %15 : vector<128xf32> to vector<1x128xf32>
    %17 = vector.broadcast %3 : f32 to vector<1x128xf32>
    %18 = arith.mulf %17, %14 : vector<1x128xf32>
    %19 = arith.subf %16, %18 : vector<1x128xf32>
    %20 = vector.broadcast %2 : f32 to vector<1x128xf32>
    %21 = arith.mulf %19, %20 : vector<1x128xf32>
    %22 = vector.broadcast %21 : vector<1x128xf32> to vector<8x128xf32>
    %23 = arith.subf %13, %22 : vector<8x128xf32>
    %24 = vector.extract_strided_slice %23 {offsets = [7, 0], sizes = [1, 128], strides = [1, 1]} : vector<8x128xf32> to vector<1x128xf32>
    %25 = arith.mulf %23, %23 : vector<8x128xf32>
    %cst_15 = arith.constant dense<0.000000e+00> : vector<128xf32>
    %26 = vector.multi_reduction <add>, %25, %cst_15 [0] : vector<8x128xf32> to vector<128xf32>
    %27 = vector.shape_cast %26 : vector<128xf32> to vector<1x128xf32>
    %28 = arith.mulf %24, %24 : vector<1x128xf32>
    %29 = vector.broadcast %3 : f32 to vector<1x128xf32>
    %30 = arith.mulf %29, %28 : vector<1x128xf32>
    %31 = arith.subf %27, %30 : vector<1x128xf32>
    %32 = vector.broadcast %2 : f32 to vector<1x128xf32>
    %33 = arith.mulf %31, %32 : vector<1x128xf32>
    %cst_16 = arith.constant 0.000000e+00 : f32
    %34 = vector.broadcast %cst_16 : f32 to vector<1x128xf32>
    %35 = arith.maximumf %33, %34 : vector<1x128xf32>
    %cst_17 = arith.constant 9.99999974E-6 : f32
    %36 = vector.broadcast %cst_17 : f32 to vector<1x128xf32>
    %37 = arith.addf %35, %36 : vector<1x128xf32>
    %38 = math.rsqrt %37 : vector<1x128xf32>
    %39 = vector.broadcast %38 : vector<1x128xf32> to vector<8x128xf32>
    %40 = arith.mulf %23, %39 : vector<8x128xf32>
    %41 = vector.broadcast %10 : vector<1x128xf32> to vector<8x128xf32>
    %42 = arith.mulf %41, %40 : vector<8x128xf32>
    %43 = vector.broadcast %11 : vector<1x128xf32> to vector<8x128xf32>
    %44 = arith.addf %42, %43 : vector<8x128xf32>
    %cst_18 = arith.constant 0.000000e+00 : f32
    %45 = vector.broadcast %cst_18 : f32 to vector<8x128xf32>
    %46 = arith.maximumf %44, %45 : vector<8x128xf32>
    %c0_19 = arith.constant 0 : index
    %c128 = arith.constant 128 : index
    %47 = vector.load %arg6[%c0_19, %c128] : memref<8x384xf32, #tpu.memory_space<vmem>>, vector<8x128xf32>
    tpu.vector_store %arg6[%c0_19, %c128], %46 {strides = array<i32>} : memref<8x384xf32, #tpu.memory_space<vmem>>, vector<8x128xf32>,
    %c0_20 = arith.constant 0 : index
    %c0_21 = arith.constant 0 : index
    %48 = vector.load %arg6[%c0_20, %c0_21] : memref<8x384xf32, #tpu.memory_space<vmem>>, vector<8x256xf32>
    %c128_22 = arith.constant 128 : index
    %c0_23 = arith.constant 0 : index
    %49 = vector.load %arg4[%c128_22, %c0_23] : memref<768x128xf32, #tpu.memory_space<vmem>>, vector<256x128xf32>
    %cst_24 = arith.constant dense<0.000000e+00> : vector<8x128xf32>
    %50 = tpu.matmul %48, %49, %cst_24 {dimension_numbers = #tpu.dot_dimension_numbers<[1], [0], [0], [1], [0, 0, 1, 1], [], []>} : vector<8x256xf32>, vector<256x128xf32>, vector<8x128xf32> -> vector<8x128xf32>
    %c8 = arith.constant 8 : index
    %c0_25 = arith.constant 0 : index
    %51 = vector.load %arg2[%c8, %c0_25] : memref<16x128xf32, #tpu.memory_space<vmem>>, vector<1x128xf32>
    %c9 = arith.constant 9 : index
    %c0_26 = arith.constant 0 : index
    %52 = vector.load %arg2[%c9, %c0_26] : memref<16x128xf32, #tpu.memory_space<vmem>>, vector<1x128xf32>
    %c10 = arith.constant 10 : index
    %c0_27 = arith.constant 0 : index
    %53 = vector.load %arg2[%c10, %c0_27] : memref<16x128xf32, #tpu.memory_space<vmem>>, vector<1x128xf32>
    %54 = vector.broadcast %51 : vector<1x128xf32> to vector<8x128xf32>
    %55 = arith.addf %50, %54 : vector<8x128xf32>
    %56 = vector.extract_strided_slice %55 {offsets = [7, 0], sizes = [1, 128], strides = [1, 1]} : vector<8x128xf32> to vector<1x128xf32>
    %cst_28 = arith.constant dense<0.000000e+00> : vector<128xf32>
    %57 = vector.multi_reduction <add>, %55, %cst_28 [0] : vector<8x128xf32> to vector<128xf32>
    %58 = vector.shape_cast %57 : vector<128xf32> to vector<1x128xf32>
    %59 = vector.broadcast %3 : f32 to vector<1x128xf32>
    %60 = arith.mulf %59, %56 : vector<1x128xf32>
    %61 = arith.subf %58, %60 : vector<1x128xf32>
    %62 = vector.broadcast %2 : f32 to vector<1x128xf32>
    %63 = arith.mulf %61, %62 : vector<1x128xf32>
    %64 = vector.broadcast %63 : vector<1x128xf32> to vector<8x128xf32>
    %65 = arith.subf %55, %64 : vector<8x128xf32>
    %66 = vector.extract_strided_slice %65 {offsets = [7, 0], sizes = [1, 128], strides = [1, 1]} : vector<8x128xf32> to vector<1x128xf32>
    %67 = arith.mulf %65, %65 : vector<8x128xf32>
    %cst_29 = arith.constant dense<0.000000e+00> : vector<128xf32>
    %68 = vector.multi_reduction <add>, %67, %cst_29 [0] : vector<8x128xf32> to vector<128xf32>
    %69 = vector.shape_cast %68 : vector<128xf32> to vector<1x128xf32>
    %70 = arith.mulf %66, %66 : vector<1x128xf32>
    %71 = vector.broadcast %3 : f32 to vector<1x128xf32>
    %72 = arith.mulf %71, %70 : vector<1x128xf32>
    %73 = arith.subf %69, %72 : vector<1x128xf32>
    %74 = vector.broadcast %2 : f32 to vector<1x128xf32>
    %75 = arith.mulf %73, %74 : vector<1x128xf32>
    %cst_30 = arith.constant 0.000000e+00 : f32
    %76 = vector.broadcast %cst_30 : f32 to vector<1x128xf32>
    %77 = arith.maximumf %75, %76 : vector<1x128xf32>
    %cst_31 = arith.constant 9.99999974E-6 : f32
    %78 = vector.broadcast %cst_31 : f32 to vector<1x128xf32>
    %79 = arith.addf %77, %78 : vector<1x128xf32>
    %80 = math.rsqrt %79 : vector<1x128xf32>
    %81 = vector.broadcast %80 : vector<1x128xf32> to vector<8x128xf32>
    %82 = arith.mulf %65, %81 : vector<8x128xf32>
    %83 = vector.broadcast %52 : vector<1x128xf32> to vector<8x128xf32>
    %84 = arith.mulf %83, %82 : vector<8x128xf32>
    %85 = vector.broadcast %53 : vector<1x128xf32> to vector<8x128xf32>
    %86 = arith.addf %84, %85 : vector<8x128xf32>
    %cst_32 = arith.constant 0.000000e+00 : f32
    %87 = vector.broadcast %cst_32 : f32 to vector<8x128xf32>
    %88 = arith.maximumf %86, %87 : vector<8x128xf32>
    %c0_33 = arith.constant 0 : index
    %c256 = arith.constant 256 : index
    %89 = vector.load %arg6[%c0_33, %c256] : memref<8x384xf32, #tpu.memory_space<vmem>>, vector<8x128xf32>
    tpu.vector_store %arg6[%c0_33, %c256], %88 {strides = array<i32>} : memref<8x384xf32, #tpu.memory_space<vmem>>, vector<8x128xf32>,
    %c0_34 = arith.constant 0 : index
    %c0_35 = arith.constant 0 : index
    %90 = vector.load %arg6[%c0_34, %c0_35] : memref<8x384xf32, #tpu.memory_space<vmem>>, vector<8x384xf32>
    %c384 = arith.constant 384 : index
    %c0_36 = arith.constant 0 : index
    %91 = vector.load %arg4[%c384, %c0_36] : memref<768x128xf32, #tpu.memory_space<vmem>>, vector<384x128xf32>
    %cst_37 = arith.constant dense<0.000000e+00> : vector<8x128xf32>
    %92 = tpu.matmul %90, %91, %cst_37 {dimension_numbers = #tpu.dot_dimension_numbers<[1], [0], [0], [1], [0, 0, 1, 1], [], []>} : vector<8x384xf32>, vector<384x128xf32>, vector<8x128xf32> -> vector<8x128xf32>
    %c0_38 = arith.constant 0 : index
    %c0_39 = arith.constant 0 : index
    %93 = vector.load %arg3[%c0_38, %c0_39] : memref<1x128xf32, #tpu.memory_space<vmem>>, vector<1x128xf32>
    %94 = vector.broadcast %93 : vector<1x128xf32> to vector<8x128xf32>
    %95 = arith.addf %92, %94 : vector<8x128xf32>
    %c0_40 = arith.constant 0 : index
    %c0_41 = arith.constant 0 : index
    %96 = vector.load %arg5[%c0_40, %c0_41] : memref<8x128xf32, #tpu.memory_space<vmem>>, vector<8x128xf32>
    tpu.vector_store %arg5[%c0_40, %c0_41], %95 {strides = array<i32>} : memref<8x128xf32, #tpu.memory_space<vmem>>, vector<8x128xf32>,
    return
  }
}

</mosaic_0001>

<llo_original>
// kernel: generator_forward.1
$region0: #{generator_forward.1}
  #allocation0 [shape = 'u32[]', space=smem, size = 0x4, offset = 0x4, fixed_abs, tag = 'smem constant byte address 0x4 - core index']
  #allocation1 [shape = 'u32[144,128]{1,0:T(1,128)}', space=vmem, size = 0x12000, scoped, tag = 'internal scratch']
  #allocation2 [shape = 'f32[8,384]{1,0:T(8,128)}', space=vmem, size = 0x3000, scoped, tag = 'scratch operand']
  #allocation3 [shape = 's32[1]{0:T(128)S(6)}', space=smem, size = 0x200, scoped, tag = 'scoped memory for generator_forward.1']
  %s0 = inlined_call_operand.<no memory space> [shape: s32[1], index: 0, kind: input, shape index: {}]
  %s1 = inlined_call_operand.vmem [shape: f32[8,128], index: 1, kind: input, shape index: {}]
  %s2 = inlined_call_operand.vmem [shape: f32[16,128], index: 2, kind: input, shape index: {}]
  %s3 = inlined_call_operand.vmem [shape: f32[1,128], index: 3, kind: input, shape index: {}]
  %s4 = inlined_call_operand.vmem [shape: f32[768,128], index: 4, kind: input, shape index: {}]
  %s5 = inlined_call_operand.hbm [shape: f32[8,128], index: 5, kind: output, shape index: {}]
  %s6 = sld [smem:[#allocation0]]
  $region30: #{generator_forward.1} parent=0
    _
  %s8 = ssub.s32 1, %s6
  %s9 = scalar_select 0, %s8, %s6
  %10 = sst [smem:[#allocation3]] %s0
  $region1: #{generator_forward.1} parent=0
    #allocation4 [shape = 'u8[4096]{0}', space=vmem, size = 0x1000, scoped, tag = 'output window, operand 0, single buffered']
    #allocation5 [shape = 's32[1]{0}', space=sflag, size = 0x4, scoped, tag = 'scoped memory for generator_forward.1']
    %11 = vsyncpa [#allocation5], 0
    // Predicated region
    $region2: #{generator_forward.1} parent=1 // pred_check
      _
    $region3: #{generator_forward.1} parent=1 // pred_check_branch
      %13 = sbr.rel (0) target = $region5
    $region4: #{generator_forward.1} parent=1 // pred_region
      _
    $region5: #{generator_forward.1} parent=1 // pred_fallthru
      _
    // Predicated region
    $region6: #{generator_forward.1} parent=1 // pred_check
      _
    $region7: #{generator_forward.1} parent=1 // pred_check_branch
      %15 = sbr.rel (0) target = $region9
    $region8: #{generator_forward.1} parent=1 // pred_region
      _
    $region9: #{generator_forward.1} parent=1 // pred_fallthru
      _
    // Predicated region
    $region10: #{generator_forward.1} parent=1 // pred_check
      _
    $region11: #{generator_forward.1} parent=1 // pred_check_branch
      %17 = sbr.rel (0) target = $region13
    $region12: #{generator_forward.1} parent=1 // pred_region
      _
    $region13: #{generator_forward.1} parent=1 // pred_fallthru
      _
    // Predicated region
    $region14: #{generator_forward.1} parent=1 // pred_check
      _
    $region15: #{generator_forward.1} parent=1 // pred_check_branch
      %19 = sbr.rel (0) target = $region17
    $region16: #{generator_forward.1} parent=1 // pred_region
      _
    $region17: #{generator_forward.1} parent=1 // pred_fallthru
      _
    // Predicated region
    $region18: #{generator_forward.1} parent=1 // pred_check
      _
    $region19: #{generator_forward.1} parent=1 // pred_check_branch
      %21 = sbr.rel (0) target = $region21
    $region20: #{generator_forward.1} parent=1 // pred_region
      _
    $region21: #{generator_forward.1} parent=1 // pred_fallthru
      _
    %s22 = sld [smem:[#allocation3]]
    %s23 = scvt.s32.f32 %s22
    %v24 = vstv %s23
    %v25 = vrcp.pop %v24
    %s26 = vtos %v25
    %s27 = ssub.f32 8.0, %s23
    %v28 = vld [vmem:[%s1] sm:$0xff]
    %29 = vst [vmem:[#allocation2] sm:$0xff] %v28
    %v30 = vld [vmem:[#allocation2] sm:$0xff]
    %v31 = vld [vmem:[%s4] sm:$0xff]
    %v32 = vld [vmem:[%s4 + $0x8] sm:$0xff]
    %v33 = vld [vmem:[%s4 + $0x10] sm:$0xff]
    %v34 = vld [vmem:[%s4 + $0x18] sm:$0xff]
    %v35 = vld [vmem:[%s4 + $0x20] sm:$0xff]
    %v36 = vld [vmem:[%s4 + $0x28] sm:$0xff]
    %v37 = vld [vmem:[%s4 + $0x30] sm:$0xff]
    %v38 = vld [vmem:[%s4 + $0x38] sm:$0xff]
    %v39 = vld [vmem:[%s4 + $0x40] sm:$0xff]
    %v40 = vld [vmem:[%s4 + $0x48] sm:$0xff]
    %v41 = vld [vmem:[%s4 + $0x50] sm:$0xff]
    %v42 = vld [vmem:[%s4 + $0x58] sm:$0xff]
    %v43 = vld [vmem:[%s4 + $0x60] sm:$0xff]
    %v44 = vld [vmem:[%s4 + $0x68] sm:$0xff]
    %v45 = vld [vmem:[%s4 + $0x70] sm:$0xff]
    %v46 = vld [vmem:[%s4 + $0x78] sm:$0xff]
    %v47 = vld [vmem:[%s2] sm:$0x1]
    %v48 = vld [vmem:[%s2 + $0x1] sm:$0x1]
    %v49 = vld [vmem:[%s2 + $0x2] sm:$0x1]
    %v50 = vlaneseq
    %v51 = vshrl.u32 %v50, 7
    %v52 = vsub.s32 0, %v51
    %v53 = vrot.slane %v47, %v52
    %54 = vmatprep.subr.mxu0 0.0
    %55 = vmatpush1.msra.mxu0 %v31
    %56 = vmatprep.subr.mxu0 0.0
    %57 = vmatpush1.msra.mxu0 %v32
    %58 = vmatprep.subr.mxu0 0.0
    %59 = vmatpush1.msra.mxu0 %v33
    %60 = vmatprep.subr.mxu0 0.0
    %61 = vmatpush1.msra.mxu0 %v34
    %62 = vmatprep.subr.mxu0 0.0
    %63 = vmatpush1.msra.mxu0 %v35
    %64 = vmatprep.subr.mxu0 0.0
    %65 = vmatpush1.msra.mxu0 %v36
    %66 = vmatprep.subr.mxu0 0.0
    %67 = vmatpush1.msra.mxu0 %v37
    %68 = vmatprep.subr.mxu0 0.0
    %69 = vmatpush1.msra.mxu0 %v38
    %70 = vmatprep.subr.mxu0 0.0
    %71 = vmatpush1.msra.mxu0 %v39
    %72 = vmatprep.subr.mxu0 0.0
    %73 = vmatpush1.msra.mxu0 %v40
    %74 = vmatprep.subr.mxu0 0.0
    %75 = vmatpush1.msra.mxu0 %v41
    %76 = vmatprep.subr.mxu0 0.0
    %77 = vmatpush1.msra.mxu0 %v42
    %78 = vmatprep.subr.mxu0 0.0
    %79 = vmatpush1.msra.mxu0 %v43
    %80 = vmatprep.subr.mxu0 0.0
    %81 = vmatpush1.msra.mxu0 %v44
    %82 = vmatprep.subr.mxu0 0.0
    %83 = vmatpush1.msra.mxu0 %v45
    %84 = vmatprep.subr.mxu0 0.0
    %85 = vmatpush1.msra.mxu0 %v46
    %86 = vmatprep.subr.mxu0 0.0
    %87 = vmatpush1.msra.mxu0 0.0
    %88 = vmatprep.subr.mxu0 0.0
    %89 = vmatpush1.msra.mxu0 0.0
    %90 = vmatprep.subr.mxu0 0.0
    %91 = vmatpush1.msra.mxu0 0.0
    %92 = vmatprep.subr.mxu0 0.0
    %93 = vmatpush1.msra.mxu0 0.0
    %94 = vmatprep.subr.mxu0 0.0
    %95 = vmatpush1.msra.mxu0 0.0
    %96 = vmatprep.subr.mxu0 0.0
    %97 = vmatpush1.msra.mxu0 0.0
    %98 = vmatprep.subr.mxu0 0.0
    %99 = vmatpush1.msra.mxu0 0.0
    %100 = vmatprep.subr.mxu0 0.0
    %101 = vmatpush1.msra.mxu0 0.0
    %102 = vmatprep.subr.mxu0 0.0
    %103 = vmatpush1.msra.mxu0 0.0
    %104 = vmatprep.subr.mxu0 0.0
    %105 = vmatpush1.msra.mxu0 0.0
    %106 = vmatprep.subr.mxu0 0.0
    %107 = vmatpush1.msra.mxu0 0.0
    %108 = vmatprep.subr.mxu0 0.0
    %109 = vmatpush1.msra.mxu0 0.0
    %110 = vmatprep.subr.mxu0 0.0
    %111 = vmatpush1.msra.mxu0 0.0
    %112 = vmatprep.subr.mxu0 0.0
    %113 = vmatpush1.msra.mxu0 0.0
    %114 = vmatprep.subr.mxu0 0.0
    %115 = vmatpush1.msra.mxu0 0.0
    %116 = vmatprep.subr.mxu0 0.0
    %117 = vmatpush1.msra.mxu0 0.0
    %118 = vmatprep.mubr.f32.mxu0 0.0
    %119 = vmatmul.mubr.f32.gmra.mrb[0].mxu0 %v30
    %v120 = vpop.f32.mrb[0].mxu0
    %v121 = vadd.f32 %v53, %v120
    %v122 = vpop.f32.mrb[0].mxu0
    %123 = vdwg.mxu0
    %v124 = vrot.slane %v121, 4
    %v125 = vadd.f32 %v121, %v124
    %v126 = vrot.slane %v125, 2
    %v127 = vadd.f32 %v125, %v126
    %v128 = vrot.slane %v127, 1
    %v129 = vadd.f32 %v127, %v128
    %v130 = vstv %s27
    %v131 = vmul.f32 %v130, %v121
    %v132 = vsub.f32 %v129, %v131
    %v133 = vstv %s26
    %v134 = vmul.f32 %v132, %v133
    %v135 = vlaneseq
    %v136 = vshrl.u32 %v135, 7
    %v137 = vsub.s32 7, %v136
    %v138 = vrot.slane %v134, %v137
    %v139 = vsub.f32 %v121, %v138
    %v140 = vmul.f32 %v139, %v139
    %v141 = vrot.slane %v140, 4
    %v142 = vadd.f32 %v140, %v141
    %v143 = vrot.slane %v142, 2
    %v144 = vadd.f32 %v142, %v143
    %v145 = vrot.slane %v144, 1
    %v146 = vadd.f32 %v144, %v145
    %v147 = vmul.f32 %v130, %v140
    %v148 = vsub.f32 %v146, %v147
    %v149 = vmul.f32 %v148, %v133
    %v150 = vmax.f32 %v149, 0.0
    %v151 = vadd.f32 %v150, 1e-05
    %v152 = vrsqrt.pop %v151
    %v153 = vlaneseq
    %v154 = vshrl.u32 %v153, 7
    %v155 = vsub.s32 7, %v154
    %v156 = vrot.slane %v152, %v155
    %v157 = vmul.f32 %v139, %v156
    %v158 = vlaneseq
    %v159 = vshrl.u32 %v158, 7
    %v160 = vsub.s32 0, %v159
    %v161 = vrot.slane %v48, %v160
    %v162 = vmul.f32 %v161, %v157
    %v163 = vlaneseq
    %v164 = vshrl.u32 %v163, 7
    %v165 = vsub.s32 0, %v164
    %v166 = vrot.slane %v49, %v165
    %v167 = vadd.f32 %v162, %v166
    %v168 = vmax.f32 %v167, 0.0
    %169 = vst [vmem:[#allocation2 + $0x8] sm:$0xff] %v168
    %v170 = vld [vmem:[#allocation2] sm:$0xff]
    %v171 = vld [vmem:[#allocation2 + $0x8] sm:$0xff]
    %v172 = vld [vmem:[%s4 + $0x80] sm:$0xff]
    %v173 = vld [vmem:[%s4 + $0x88] sm:$0xff]
    %v174 = vld [vmem:[%s4 + $0x90] sm:$0xff]
    %v175 = vld [vmem:[%s4 + $0x98] sm:$0xff]
    %v176 = vld [vmem:[%s4 + $0xa0] sm:$0xff]
    %v177 = vld [vmem:[%s4 + $0xa8] sm:$0xff]
    %v178 = vld [vmem:[%s4 + $0xb0] sm:$0xff]
    %v179 = vld [vmem:[%s4 + $0xb8] sm:$0xff]
    %v180 = vld [vmem:[%s4 + $0xc0] sm:$0xff]
    %v181 = vld [vmem:[%s4 + $0xc8] sm:$0xff]
    %v182 = vld [vmem:[%s4 + $0xd0] sm:$0xff]
    %v183 = vld [vmem:[%s4 + $0xd8] sm:$0xff]
    %v184 = vld [vmem:[%s4 + $0xe0] sm:$0xff]
    %v185 = vld [vmem:[%s4 + $0xe8] sm:$0xff]
    %v186 = vld [vmem:[%s4 + $0xf0] sm:$0xff]
    %v187 = vld [vmem:[%s4 + $0xf8] sm:$0xff]
    %v188 = vld [vmem:[%s4 + $0x100] sm:$0xff]
    %v189 = vld [vmem:[%s4 + $0x108] sm:$0xff]
    %v190 = vld [vmem:[%s4 + $0x110] sm:$0xff]
    %v191 = vld [vmem:[%s4 + $0x118] sm:$0xff]
    %v192 = vld [vmem:[%s4 + $0x120] sm:$0xff]
    %v193 = vld [vmem:[%s4 + $0x128] sm:$0xff]
    %v194 = vld [vmem:[%s4 + $0x130] sm:$0xff]
    %v195 = vld [vmem:[%s4 + $0x138] sm:$0xff]
    %v196 = vld [vmem:[%s4 + $0x140] sm:$0xff]
    %v197 = vld [vmem:[%s4 + $0x148] sm:$0xff]
    %v198 = vld [vmem:[%s4 + $0x150] sm:$0xff]
    %v199 = vld [vmem:[%s4 + $0x158] sm:$0xff]
    %v200 = vld [vmem:[%s4 + $0x160] sm:$0xff]
    %v201 = vld [vmem:[%s4 + $0x168] sm:$0xff]
    %v202 = vld [vmem:[%s4 + $0x170] sm:$0xff]
    %v203 = vld [vmem:[%s4 + $0x178] sm:$0xff]
    %v204 = vld [vmem:[%s2 + $0x8] sm:$0x1]
    %v205 = vld [vmem:[%s2 + $0x9] sm:$0x1]
    %v206 = vld [vmem:[%s2 + $0xa] sm:$0x1]
    %v207 = vlaneseq
    %v208 = vshrl.u32 %v207, 7
    %v209 = vsub.s32 0, %v208
    %v210 = vrot.slane %v204, %v209
    %211 = vmatprep.subr.mxu0 0.0
    %212 = vmatpush1.msra.mxu0 %v172
    %213 = vmatprep.subr.mxu0 0.0
    %214 = vmatpush1.msra.mxu0 %v173
    %215 = vmatprep.subr.mxu0 0.0
    %216 = vmatpush1.msra.mxu0 %v174
    %217 = vmatprep.subr.mxu0 0.0
    %218 = vmatpush1.msra.mxu0 %v175
    %219 = vmatprep.subr.mxu0 0.0
    %220 = vmatpush1.msra.mxu0 %v176
    %221 = vmatprep.subr.mxu0 0.0
    %222 = vmatpush1.msra.mxu0 %v177
    %223 = vmatprep.subr.mxu0 0.0
    %224 = vmatpush1.msra.mxu0 %v178
    %225 = vmatprep.subr.mxu0 0.0
    %226 = vmatpush1.msra.mxu0 %v179
    %227 = vmatprep.subr.mxu0 0.0
    %228 = vmatpush1.msra.mxu0 %v180
    %229 = vmatprep.subr.mxu0 0.0
    %230 = vmatpush1.msra.mxu0 %v181
    %231 = vmatprep.subr.mxu0 0.0
    %232 = vmatpush1.msra.mxu0 %v182
    %233 = vmatprep.subr.mxu0 0.0
    %234 = vmatpush1.msra.mxu0 %v183
    %235 = vmatprep.subr.mxu0 0.0
    %236 = vmatpush1.msra.mxu0 %v184
    %237 = vmatprep.subr.mxu0 0.0
    %238 = vmatpush1.msra.mxu0 %v185
    %239 = vmatprep.subr.mxu0 0.0
    %240 = vmatpush1.msra.mxu0 %v186
    %241 = vmatprep.subr.mxu0 0.0
    %242 = vmatpush1.msra.mxu0 %v187
    %243 = vmatprep.subr.mxu0 0.0
    %244 = vmatpush1.msra.mxu0 %v188
    %245 = vmatprep.subr.mxu0 0.0
    %246 = vmatpush1.msra.mxu0 %v189
    %247 = vmatprep.subr.mxu0 0.0
    %248 = vmatpush1.msra.mxu0 %v190
    %249 = vmatprep.subr.mxu0 0.0
    %250 = vmatpush1.msra.mxu0 %v191
    %251 = vmatprep.subr.mxu0 0.0
    %252 = vmatpush1.msra.mxu0 %v192
    %253 = vmatprep.subr.mxu0 0.0
    %254 = vmatpush1.msra.mxu0 %v193
    %255 = vmatprep.subr.mxu0 0.0
    %256 = vmatpush1.msra.mxu0 %v194
    %257 = vmatprep.subr.mxu0 0.0
    %258 = vmatpush1.msra.mxu0 %v195
    %259 = vmatprep.subr.mxu0 0.0
    %260 = vmatpush1.msra.mxu0 %v196
    %261 = vmatprep.subr.mxu0 0.0
    %262 = vmatpush1.msra.mxu0 %v197
    %263 = vmatprep.subr.mxu0 0.0
    %264 = vmatpush1.msra.mxu0 %v198
    %265 = vmatprep.subr.mxu0 0.0
    %266 = vmatpush1.msra.mxu0 %v199
    %267 = vmatprep.subr.mxu0 0.0
    %268 = vmatpush1.msra.mxu0 %v200
    %269 = vmatprep.subr.mxu0 0.0
    %270 = vmatpush1.msra.mxu0 %v201
    %271 = vmatprep.subr.mxu0 0.0
    %272 = vmatpush1.msra.mxu0 %v202
    %273 = vmatprep.subr.mxu0 0.0
    %274 = vmatpush1.msra.mxu0 %v203
    %275 = vmatprep.mubr.f32.mxu0 %v171
    %276 = vmatmul.mubr.f32.gmra.mrb[0].mxu0 %v170
    %v277 = vpop.f32.mrb[0].mxu0
    %v278 = vadd.f32 %v210, %v277
    %v279 = vpop.f32.mrb[0].mxu0
    %280 = vdwg.mxu0
    %v281 = vrot.slane %v278, 4
    %v282 = vadd.f32 %v278, %v281
    %v283 = vrot.slane %v282, 2
    %v284 = vadd.f32 %v282, %v283
    %v285 = vrot.slane %v284, 1
    %v286 = vadd.f32 %v284, %v285
    %v287 = vmul.f32 %v130, %v278
    %v288 = vsub.f32 %v286, %v287
    %v289 = vmul.f32 %v288, %v133
    %v290 = vlaneseq
    %v291 = vshrl.u32 %v290, 7
    %v292 = vsub.s32 7, %v291
    %v293 = vrot.slane %v289, %v292
    %v294 = vsub.f32 %v278, %v293
    %v295 = vmul.f32 %v294, %v294
    %v296 = vrot.slane %v295, 4
    %v297 = vadd.f32 %v295, %v296
    %v298 = vrot.slane %v297, 2
    %v299 = vadd.f32 %v297, %v298
    %v300 = vrot.slane %v299, 1
    %v301 = vadd.f32 %v299, %v300
    %v302 = vmul.f32 %v130, %v295
    %v303 = vsub.f32 %v301, %v302
    %v304 = vmul.f32 %v303, %v133
    %v305 = vmax.f32 %v304, 0.0
    %v306 = vadd.f32 %v305, 1e-05
    %v307 = vrsqrt.pop %v306
    %v308 = vlaneseq
    %v309 = vshrl.u32 %v308, 7
    %v310 = vsub.s32 7, %v309
    %v311 = vrot.slane %v307, %v310
    %v312 = vmul.f32 %v294, %v311
    %v313 = vlaneseq
    %v314 = vshrl.u32 %v313, 7
    %v315 = vsub.s32 0, %v314
    %v316 = vrot.slane %v205, %v315
    %v317 = vmul.f32 %v316, %v312
    %v318 = vlaneseq
    %v319 = vshrl.u32 %v318, 7
    %v320 = vsub.s32 0, %v319
    %v321 = vrot.slane %v206, %v320
    %v322 = vadd.f32 %v317, %v321
    %v323 = vmax.f32 %v322, 0.0
    %324 = vst [vmem:[#allocation2 + $0x10] sm:$0xff] %v323
    %v325 = vld [vmem:[#allocation2] sm:$0xff]
    %v326 = vld [vmem:[#allocation2 + $0x8] sm:$0xff]
    %v327 = vld [vmem:[#allocation2 + $0x10] sm:$0xff]
    %v328 = vld [vmem:[%s4 + $0x180] sm:$0xff]
    %v329 = vld [vmem:[%s4 + $0x188] sm:$0xff]
    %v330 = vld [vmem:[%s4 + $0x190] sm:$0xff]
    %v331 = vld [vmem:[%s4 + $0x198] sm:$0xff]
    %v332 = vld [vmem:[%s4 + $0x1a0] sm:$0xff]
    %v333 = vld [vmem:[%s4 + $0x1a8] sm:$0xff]
    %v334 = vld [vmem:[%s4 + $0x1b0] sm:$0xff]
    %v335 = vld [vmem:[%s4 + $0x1b8] sm:$0xff]
    %v336 = vld [vmem:[%s4 + $0x1c0] sm:$0xff]
    %v337 = vld [vmem:[%s4 + $0x1c8] sm:$0xff]
    %v338 = vld [vmem:[%s4 + $0x1d0] sm:$0xff]
    %v339 = vld [vmem:[%s4 + $0x1d8] sm:$0xff]
    %v340 = vld [vmem:[%s4 + $0x1e0] sm:$0xff]
    %v341 = vld [vmem:[%s4 + $0x1e8] sm:$0xff]
    %v342 = vld [vmem:[%s4 + $0x1f0] sm:$0xff]
    %v343 = vld [vmem:[%s4 + $0x1f8] sm:$0xff]
    %v344 = vld [vmem:[%s4 + $0x200] sm:$0xff]
    %v345 = vld [vmem:[%s4 + $0x208] sm:$0xff]
    %v346 = vld [vmem:[%s4 + $0x210] sm:$0xff]
    %v347 = vld [vmem:[%s4 + $0x218] sm:$0xff]
    %v348 = vld [vmem:[%s4 + $0x220] sm:$0xff]
    %v349 = vld [vmem:[%s4 + $0x228] sm:$0xff]
    %v350 = vld [vmem:[%s4 + $0x230] sm:$0xff]
    %v351 = vld [vmem:[%s4 + $0x238] sm:$0xff]
    %v352 = vld [vmem:[%s4 + $0x240] sm:$0xff]
    %v353 = vld [vmem:[%s4 + $0x248] sm:$0xff]
    %v354 = vld [vmem:[%s4 + $0x250] sm:$0xff]
    %v355 = vld [vmem:[%s4 + $0x258] sm:$0xff]
    %v356 = vld [vmem:[%s4 + $0x260] sm:$0xff]
    %v357 = vld [vmem:[%s4 + $0x268] sm:$0xff]
    %v358 = vld [vmem:[%s4 + $0x270] sm:$0xff]
    %v359 = vld [vmem:[%s4 + $0x278] sm:$0xff]
    %v360 = vld [vmem:[%s4 + $0x280] sm:$0xff]
    %v361 = vld [vmem:[%s4 + $0x288] sm:$0xff]
    %v362 = vld [vmem:[%s4 + $0x290] sm:$0xff]
    %v363 = vld [vmem:[%s4 + $0x298] sm:$0xff]
    %v364 = vld [vmem:[%s4 + $0x2a0] sm:$0xff]
    %v365 = vld [vmem:[%s4 + $0x2a8] sm:$0xff]
    %v366 = vld [vmem:[%s4 + $0x2b0] sm:$0xff]
    %v367 = vld [vmem:[%s4 + $0x2b8] sm:$0xff]
    %v368 = vld [vmem:[%s4 + $0x2c0] sm:$0xff]
    %v369 = vld [vmem:[%s4 + $0x2c8] sm:$0xff]
    %v370 = vld [vmem:[%s4 + $0x2d0] sm:$0xff]
    %v371 = vld [vmem:[%s4 + $0x2d8] sm:$0xff]
    %v372 = vld [vmem:[%s4 + $0x2e0] sm:$0xff]
    %v373 = vld [vmem:[%s4 + $0x2e8] sm:$0xff]
    %v374 = vld [vmem:[%s4 + $0x2f0] sm:$0xff]
    %v375 = vld [vmem:[%s4 + $0x2f8] sm:$0xff]
    %v376 = vld [vmem:[%s3] sm:$0x1]
    %v378 = vlaneseq
    %v379 = vshrl.u32 %v378, 7
    %v380 = vsub.s32 0, %v379
    %v381 = vrot.slane %v376, %v380
    %383 = vmatprep.subr.mxu0 0.0
    %384 = vmatpush1.msra.mxu0 %v328
    %385 = vmatprep.subr.mxu0 0.0
    %386 = vmatpush1.msra.mxu0 %v329
    %387 = vmatprep.subr.mxu0 0.0
    %388 = vmatpush1.msra.mxu0 %v330
    %389 = vmatprep.subr.mxu0 0.0
    %390 = vmatpush1.msra.mxu0 %v331
    %391 = vmatprep.subr.mxu0 0.0
    %392 = vmatpush1.msra.mxu0 %v332
    %393 = vmatprep.subr.mxu0 0.0
    %394 = vmatpush1.msra.mxu0 %v333
    %395 = vmatprep.subr.mxu0 0.0
    %396 = vmatpush1.msra.mxu0 %v334
    %397 = vmatprep.subr.mxu0 0.0
    %398 = vmatpush1.msra.mxu0 %v335
    %399 = vmatprep.subr.mxu0 0.0
    %400 = vmatpush1.msra.mxu0 %v336
    %401 = vmatprep.subr.mxu0 0.0
    %402 = vmatpush1.msra.mxu0 %v337
    %403 = vmatprep.subr.mxu0 0.0
    %404 = vmatpush1.msra.mxu0 %v338
    %405 = vmatprep.subr.mxu0 0.0
    %406 = vmatpush1.msra.mxu0 %v339
    %407 = vmatprep.subr.mxu0 0.0
    %408 = vmatpush1.msra.mxu0 %v340
    %409 = vmatprep.subr.mxu0 0.0
    %410 = vmatpush1.msra.mxu0 %v341
    %411 = vmatprep.subr.mxu0 0.0
    %412 = vmatpush1.msra.mxu0 %v342
    %413 = vmatprep.subr.mxu0 0.0
    %414 = vmatpush1.msra.mxu0 %v343
    %415 = vmatprep.subr.mxu0 0.0
    %416 = vmatpush1.msra.mxu0 %v344
    %417 = vmatprep.subr.mxu0 0.0
    %418 = vmatpush1.msra.mxu0 %v345
    %419 = vmatprep.subr.mxu0 0.0
    %420 = vmatpush1.msra.mxu0 %v346
    %421 = vmatprep.subr.mxu0 0.0
    %422 = vmatpush1.msra.mxu0 %v347
    %423 = vmatprep.subr.mxu0 0.0
    %424 = vmatpush1.msra.mxu0 %v348
    %425 = vmatprep.subr.mxu0 0.0
    %426 = vmatpush1.msra.mxu0 %v349
    %427 = vmatprep.subr.mxu0 0.0
    %428 = vmatpush1.msra.mxu0 %v350
    %429 = vmatprep.subr.mxu0 0.0
    %430 = vmatpush1.msra.mxu0 %v351
    %431 = vmatprep.subr.mxu0 0.0
    %432 = vmatpush1.msra.mxu0 %v352
    %433 = vmatprep.subr.mxu0 0.0
    %434 = vmatpush1.msra.mxu0 %v353
    %435 = vmatprep.subr.mxu0 0.0
    %436 = vmatpush1.msra.mxu0 %v354
    %437 = vmatprep.subr.mxu0 0.0
    %438 = vmatpush1.msra.mxu0 %v355
    %439 = vmatprep.subr.mxu0 0.0
    %440 = vmatpush1.msra.mxu0 %v356
    %441 = vmatprep.subr.mxu0 0.0
    %442 = vmatpush1.msra.mxu0 %v357
    %443 = vmatprep.subr.mxu0 0.0
    %444 = vmatpush1.msra.mxu0 %v358
    %445 = vmatprep.subr.mxu0 0.0
    %446 = vmatpush1.msra.mxu0 %v359
    %447 = vmatprep.mubr.f32.mxu0 %v326
    %448 = vmatmul.mubr.f32.gmra.mrb[0].mxu0 %v325
    %v449 = vpop.f32.mrb[0].mxu0
    %v450 = vadd.f32 %v381, %v449
    %v451 = vpop.f32.mrb[0].mxu0
    %452 = vdwg.mxu0
    %453 = vmatprep.subr.mxu0 0.0
    %454 = vmatpush1.msra.mxu0 %v360
    %455 = vmatprep.subr.mxu0 0.0
    %456 = vmatpush1.msra.mxu0 %v361
    %457 = vmatprep.subr.mxu0 0.0
    %458 = vmatpush1.msra.mxu0 %v362
    %459 = vmatprep.subr.mxu0 0.0
    %460 = vmatpush1.msra.mxu0 %v363
    %461 = vmatprep.subr.mxu0 0.0
    %462 = vmatpush1.msra.mxu0 %v364
    %463 = vmatprep.subr.mxu0 0.0
    %464 = vmatpush1.msra.mxu0 %v365
    %465 = vmatprep.subr.mxu0 0.0
    %466 = vmatpush1.msra.mxu0 %v366
    %467 = vmatprep.subr.mxu0 0.0
    %468 = vmatpush1.msra.mxu0 %v367
    %469 = vmatprep.subr.mxu0 0.0
    %470 = vmatpush1.msra.mxu0 %v368
    %471 = vmatprep.subr.mxu0 0.0
    %472 = vmatpush1.msra.mxu0 %v369
    %473 = vmatprep.subr.mxu0 0.0
    %474 = vmatpush1.msra.mxu0 %v370
    %475 = vmatprep.subr.mxu0 0.0
    %476 = vmatpush1.msra.mxu0 %v371
    %477 = vmatprep.subr.mxu0 0.0
    %478 = vmatpush1.msra.mxu0 %v372
    %479 = vmatprep.subr.mxu0 0.0
    %480 = vmatpush1.msra.mxu0 %v373
    %481 = vmatprep.subr.mxu0 0.0
    %482 = vmatpush1.msra.mxu0 %v374
    %483 = vmatprep.subr.mxu0 0.0
    %484 = vmatpush1.msra.mxu0 %v375
    %485 = vmatprep.subr.mxu0 0.0
    %486 = vmatpush1.msra.mxu0 0.0
    %487 = vmatprep.subr.mxu0 0.0
    %488 = vmatpush1.msra.mxu0 0.0
    %489 = vmatprep.subr.mxu0 0.0
    %490 = vmatpush1.msra.mxu0 0.0
    %491 = vmatprep.subr.mxu0 0.0
    %492 = vmatpush1.msra.mxu0 0.0
    %493 = vmatprep.subr.mxu0 0.0
    %494 = vmatpush1.msra.mxu0 0.0
    %495 = vmatprep.subr.mxu0 0.0
    %496 = vmatpush1.msra.mxu0 0.0
    %497 = vmatprep.subr.mxu0 0.0
    %498 = vmatpush1.msra.mxu0 0.0
    %499 = vmatprep.subr.mxu0 0.0
    %500 = vmatpush1.msra.mxu0 0.0
    %501 = vmatprep.subr.mxu0 0.0
    %502 = vmatpush1.msra.mxu0 0.0
    %503 = vmatprep.subr.mxu0 0.0
    %504 = vmatpush1.msra.mxu0 0.0
    %505 = vmatprep.subr.mxu0 0.0
    %506 = vmatpush1.msra.mxu0 0.0
    %507 = vmatprep.subr.mxu0 0.0
    %508 = vmatpush1.msra.mxu0 0.0
    %509 = vmatprep.subr.mxu0 0.0
    %510 = vmatpush1.msra.mxu0 0.0
    %511 = vmatprep.subr.mxu0 0.0
    %512 = vmatpush1.msra.mxu0 0.0
    %513 = vmatprep.subr.mxu0 0.0
    %514 = vmatpush1.msra.mxu0 0.0
    %515 = vmatprep.subr.mxu0 0.0
    %516 = vmatpush1.msra.mxu0 0.0
    %517 = vmatprep.mubr.f32.mxu0 0.0
    %518 = vmatmul.mubr.f32.gmra.mrb[0].mxu0 %v327
    %v519 = vpop.f32.mrb[0].mxu0
    %v520 = vadd.f32 %v450, %v519
    %v521 = vpop.f32.mrb[0].mxu0
    %522 = vdwg.mxu0
    %523 = vst [vmem:[#allocation4] sm:$0xff] %v520
    // Predicated region
    $region22: #{generator_forward.1} parent=1 // pred_check
      _
    $region23: #{generator_forward.1} parent=1 // pred_check_branch
      %525 = sbr.rel (0) target = $region25
    $region24: #{generator_forward.1} parent=1 // pred_region
      %s527 = ssub.s32 128, 128
      %528 = vsyncadd [#allocation5], %s527
      %s530 = sshll.u32 [#allocation4], 4
      %s531 = int_to_ptr.vmem [resolvable:$true] %s530
      %533 = dma.vmem_to_hbm [thread:$0]  %s531, 128, %s5, [#allocation5]
    $region25: #{generator_forward.1} parent=1 // pred_fallthru
      _
    // Predicated region
    $region26: #{generator_forward.1} parent=1 // pred_check
      _
    $region27: #{generator_forward.1} parent=1 // pred_check_branch
      %535 = sbr.rel (0) target = $region29
    $region28: #{generator_forward.1} parent=1 // pred_region
      %536 = dma.done [#allocation5], 128
    $region29: #{generator_forward.1} parent=1 // pred_fallthru
      _
    %537 = vsyncpa [#allocation5], 1

</llo_original>
